<compile_context>
chip_gen: v7x
topology: tpu7x:2x2x1
jax: 0.10.0
libtpu: 0.0.40
codegen_flags: <defaults>
</compile_context>

<pallas_src>
import jax
import jax.numpy as jnp
from jax.experimental import pallas as pl
from jax.experimental.pallas import tpu as pltpu

LN_EPS = 1e-12


def _round_up(x, m):
    return ((x + m - 1) // m) * m


def _fused_dense_add_ln_kernel(x_ref, res_ref, w_ref, b_ref, g_ref, beta_ref, o_ref):
    # x_ref:   (TM, H)  hidden-states tile (c rows or q rows), native dtype
    # res_ref: (TM, H)  residual (cinput) tile
    # w_ref:   (H, H)   dense weight, pre-transposed to (in, out), native dtype
    # b_ref:   (1, H)   dense bias
    # g_ref:   (1, H)   LayerNorm gamma
    # beta_ref:(1, H)   LayerNorm beta
    #
    # Matmul in native dtype, f32 accumulation on the MXU.
    y = jnp.dot(x_ref[...], w_ref[...], preferred_element_type=jnp.float32)
    y = y + b_ref[...].astype(jnp.float32)
    # dropout == identity (eval); residual add (cinput for both branches).
    y = y + res_ref[...].astype(jnp.float32)

    # BertLayerNorm: mean/biased-variance over last axis, eps inside rsqrt.
    u = jnp.mean(y, axis=-1, keepdims=True)
    d = y - u
    s = jnp.mean(d * d, axis=-1, keepdims=True)
    norm = d * jax.lax.rsqrt(s + LN_EPS)
    out = g_ref[...].astype(jnp.float32) * norm + beta_ref[...].astype(jnp.float32)
    o_ref[...] = out.astype(o_ref.dtype)


def fused_dense_add_layernorm_2branch(xc, xq, residual, w_t, b, gamma, beta, *, tm=256):
    """Both branches in one pallas_call.

    xc, xq, residual: (M, H).  w_t: (H, H) = W.T (pre-transposed, (in, out)).
    b, gamma, beta: (H,).  Returns (c_out, q_out), each (M, H).
    """
    M, H = xc.shape
    dtype = xc.dtype

    # Effective row tile: large (MXU-shaped) but never bigger than the padded M.
    tm_eff = min(tm, _round_up(M, 8))
    M_pad = _round_up(M, tm_eff)
    nb = M_pad // tm_eff                      # blocks per branch
    pad = M_pad - M
    if pad:
        xc = jnp.pad(xc, ((0, pad), (0, 0)))
        xq = jnp.pad(xq, ((0, pad), (0, 0)))
        residual = jnp.pad(residual, ((0, pad), (0, 0)))

    # Concatenate branches along M: one launch, weight loaded once, both
    # TensorCores busy on v7x via the "parallel" M axis.
    x_all = jnp.concatenate([xc, xq], axis=0)         # (2*M_pad, H)

    b2 = b.reshape(1, H)
    g2 = gamma.reshape(1, H)
    be2 = beta.reshape(1, H)

    itm = jnp.dtype(dtype).itemsize
    itw = jnp.dtype(w_t.dtype).itemsize

    # VMEM budget: x/res/out tiles double-buffered + resident weight
    # (double-buffered constant block) + small vectors + headroom.
    vmem_needed = (3 * 2 * tm_eff * H * itm) + (2 * H * H * itw) + (3 * 2 * H * 4) + (4 << 20)
    vmem_limit = int(min(64 << 20, max(32 << 20, vmem_needed)))

    rows = 2 * M_pad
    cost = pl.CostEstimate(
        flops=2 * rows * H * H,
        transcendentals=rows,                 # one rsqrt per row
        bytes_accessed=(3 * rows * H * itm) + (M_pad * H * itm) + (H * H * itw),
    )

    grid = (2 * nb,)
    out = pl.pallas_call(
        _fused_dense_add_ln_kernel,
        out_shape=jax.ShapeDtypeStruct((rows, H), dtype),
        grid_spec=pltpu.PrefetchScalarGridSpec(
            num_scalar_prefetch=0,
            grid=grid,
            in_specs=[
                pl.BlockSpec((tm_eff, H), lambda i: (i, 0)),        # x tile (c then q rows)
                pl.BlockSpec((tm_eff, H), lambda i: (i % nb, 0)),   # cinput residual, reused by both halves
                pl.BlockSpec((H, H), lambda i: (0, 0)),             # weight (resident)
                pl.BlockSpec((1, H), lambda i: (0, 0)),             # bias
                pl.BlockSpec((1, H), lambda i: (0, 0)),             # gamma
                pl.BlockSpec((1, H), lambda i: (0, 0)),             # beta
            ],
            out_specs=pl.BlockSpec((tm_eff, H), lambda i: (i, 0)),
        ),
        compiler_params=pltpu.CompilerParams(
            dimension_semantics=("parallel",),
            vmem_limit_bytes=vmem_limit,
        ),
        cost_estimate=cost,
    )(x_all, residual, w_t, b2, g2, be2)

    c_out = out[:M]
    q_out = out[M_pad:M_pad + M]
    return c_out, q_out


def bert_de_self_output(chidden, qhidden, cinput, qinput, params, *, tm=256):
    """Mirrors BertDeSelfOutput.forward.

    chidden, qhidden, cinput, qinput: (B, S, H).
    Faithful to the reference: uses self.dense / self.LayerNorm for both
    branches and `cinput` as the residual for both; qinput is unused.
    """
    del qinput  # unused by the reference forward
    B, S, H = chidden.shape
    c2, q2 = fused_dense_add_layernorm_2branch(
        chidden.reshape(B * S, H),
        qhidden.reshape(B * S, H),
        cinput.reshape(B * S, H),
        params["dense_w_t"],
        params["dense_b"],
        params["ln_gamma"],
        params["ln_beta"],
        tm=tm,
    )
    return c2.reshape(B, S, H), q2.reshape(B, S, H)


def init_params(key, hidden, dtype=jnp.float32):
    k1, k2 = jax.random.split(key, 2)
    dense_w = jax.random.normal(k1, (hidden, hidden), dtype) * 0.02
    params = {
        "dense_w": dense_w,
        "dense_w_t": dense_w.T,   # pre-transposed ONCE (in, out); no per-forward transpose
        "dense_b": jax.random.normal(k2, (hidden,), dtype) * 0.02,
        "ln_gamma": jnp.ones((hidden,), dtype),
        "ln_beta": jnp.zeros((hidden,), dtype),
        # TODO(synk): qdense/qLayerNorm parameters omitted since forward never calls them.
    }
    return params


if __name__ == "__main__":
    def ref(h, res, params):
        y = h @ params["dense_w_t"] + params["dense_b"]
        y = y + res
        u = y.mean(-1, keepdims=True)
        s = ((y - u) ** 2).mean(-1, keepdims=True)
        yn = (y - u) / jnp.sqrt(s + LN_EPS)
        return params["ln_gamma"] * yn + params["ln_beta"]

    fwd = jax.jit(bert_de_self_output)

    key = jax.random.PRNGKey(0)
    # Second config has M = B*S not a multiple of 8 to exercise padding.
    for (B, S, H) in [(2, 8, 128), (2, 9, 128)]:
        kc, kq, kci, kqi, kp, key = jax.random.split(key, 6)
        chidden = jax.random.normal(kc, (B, S, H), jnp.float32)
        qhidden = jax.random.normal(kq, (B, S, H), jnp.float32)
        cinput = jax.random.normal(kci, (B, S, H), jnp.float32)
        qinput = jax.random.normal(kqi, (B, S, H), jnp.float32)
        params = init_params(kp, H)

        c_out, q_out = fwd(chidden, qhidden, cinput, qinput, params)
        jax.block_until_ready((c_out, q_out))

        c_ref = ref(chidden, cinput, params)
        q_ref = ref(qhidden, cinput, params)
        assert jnp.allclose(c_out, c_ref, atol=1e-4, rtol=1e-4), "c branch mismatch"
        assert jnp.allclose(q_out, q_ref, atol=1e-4, rtol=1e-4), "q branch mismatch"

    print("KERNEL_OK")
</pallas_src>

<mosaic_0001>
module attributes {stable_mosaic.version = 11 : i64} {
  func.func @_fused_dense_add_ln_kernel(%arg0: i32, %arg1: memref<16x128xf32, #tpu.memory_space<vmem>>, %arg2: memref<16x128xf32, #tpu.memory_space<vmem>>, %arg3: memref<128x128xf32, #tpu.memory_space<vmem>>, %arg4: memref<1x128xf32, #tpu.memory_space<vmem>>, %arg5: memref<1x128xf32, #tpu.memory_space<vmem>>, %arg6: memref<1x128xf32, #tpu.memory_space<vmem>>, %arg7: memref<16x128xf32, #tpu.memory_space<vmem>>) attributes {dimension_semantics = [#tpu.dimension_semantics<parallel>], iteration_bounds = array<i64: 2>, scalar_prefetch = 0 : i64, scratch_operands = 0 : i64, tpu.core_type = #tpu.core_type<tc>, window_params = [{transform_indices = @transform_0, window_bounds = array<i64: 16, 128>}, {transform_indices = @transform_1, window_bounds = array<i64: 16, 128>}, {pipeline_mode = #tpu.pipeline_mode<synchronous>, transform_indices = @transform_2, window_bounds = array<i64: 128, 128>}, {pipeline_mode = #tpu.pipeline_mode<synchronous>, transform_indices = @transform_3, window_bounds = array<i64: 1, 128>}, {pipeline_mode = #tpu.pipeline_mode<synchronous>, transform_indices = @transform_4, window_bounds = array<i64: 1, 128>}, {pipeline_mode = #tpu.pipeline_mode<synchronous>, transform_indices = @transform_5, window_bounds = array<i64: 1, 128>}, {transform_indices = @transform_6, window_bounds = array<i64: 16, 128>}]} {
    %c0 = arith.constant 0 : index
    %c0_0 = arith.constant 0 : index
    %0 = vector.load %arg1[%c0, %c0_0] : memref<16x128xf32, #tpu.memory_space<vmem>>, vector<16x128xf32>
    %c0_1 = arith.constant 0 : index
    %c0_2 = arith.constant 0 : index
    %1 = vector.load %arg3[%c0_1, %c0_2] : memref<128x128xf32, #tpu.memory_space<vmem>>, vector<128x128xf32>
    %cst = arith.constant dense<0.000000e+00> : vector<16x128xf32>
    %2 = tpu.matmul %0, %1, %cst {dimension_numbers = #tpu.dot_dimension_numbers<[1], [0], [0], [1], [0, 0, 1, 1], [], []>} : vector<16x128xf32>, vector<128x128xf32>, vector<16x128xf32> -> vector<16x128xf32>
    %c0_3 = arith.constant 0 : index
    %c0_4 = arith.constant 0 : index
    %3 = vector.load %arg4[%c0_3, %c0_4] : memref<1x128xf32, #tpu.memory_space<vmem>>, vector<1x128xf32>
    %4 = vector.broadcast %3 : vector<1x128xf32> to vector<16x128xf32>
    %5 = arith.addf %2, %4 : vector<16x128xf32>
    %c0_5 = arith.constant 0 : index
    %c0_6 = arith.constant 0 : index
    %6 = vector.load %arg2[%c0_5, %c0_6] : memref<16x128xf32, #tpu.memory_space<vmem>>, vector<16x128xf32>
    %7 = arith.addf %5, %6 : vector<16x128xf32>
    %cst_7 = arith.constant dense<0.000000e+00> : vector<16xf32>
    %8 = vector.multi_reduction <add>, %7, %cst_7 [1] : vector<16x128xf32> to vector<16xf32>
    %9 = vector.shape_cast %8 : vector<16xf32> to vector<16x1xf32>
    %cst_8 = arith.constant 1.280000e+02 : f32
    %10 = vector.broadcast %cst_8 : f32 to vector<16x1xf32>
    %11 = arith.divf %9, %10 : vector<16x1xf32>
    %12 = vector.broadcast %11 : vector<16x1xf32> to vector<16x128xf32>
    %13 = arith.subf %7, %12 : vector<16x128xf32>
    %14 = arith.mulf %13, %13 : vector<16x128xf32>
    %cst_9 = arith.constant dense<0.000000e+00> : vector<16xf32>
    %15 = vector.multi_reduction <add>, %14, %cst_9 [1] : vector<16x128xf32> to vector<16xf32>
    %16 = vector.shape_cast %15 : vector<16xf32> to vector<16x1xf32>
    %cst_10 = arith.constant 1.280000e+02 : f32
    %17 = vector.broadcast %cst_10 : f32 to vector<16x1xf32>
    %18 = arith.divf %16, %17 : vector<16x1xf32>
    %cst_11 = arith.constant 9.99999996E-13 : f32
    %19 = vector.broadcast %cst_11 : f32 to vector<16x1xf32>
    %20 = arith.addf %18, %19 : vector<16x1xf32>
    %21 = math.rsqrt %20 : vector<16x1xf32>
    %22 = vector.broadcast %21 : vector<16x1xf32> to vector<16x128xf32>
    %23 = arith.mulf %13, %22 : vector<16x128xf32>
    %c0_12 = arith.constant 0 : index
    %c0_13 = arith.constant 0 : index
    %24 = vector.load %arg5[%c0_12, %c0_13] : memref<1x128xf32, #tpu.memory_space<vmem>>, vector<1x128xf32>
    %25 = vector.broadcast %24 : vector<1x128xf32> to vector<16x128xf32>
    %26 = arith.mulf %25, %23 : vector<16x128xf32>
    %c0_14 = arith.constant 0 : index
    %c0_15 = arith.constant 0 : index
    %27 = vector.load %arg6[%c0_14, %c0_15] : memref<1x128xf32, #tpu.memory_space<vmem>>, vector<1x128xf32>
    %28 = vector.broadcast %27 : vector<1x128xf32> to vector<16x128xf32>
    %29 = arith.addf %26, %28 : vector<16x128xf32>
    %c0_16 = arith.constant 0 : index
    %c0_17 = arith.constant 0 : index
    %30 = vector.load %arg7[%c0_16, %c0_17] : memref<16x128xf32, #tpu.memory_space<vmem>>, vector<16x128xf32>
    tpu.vector_store %arg7[%c0_16, %c0_17], %29 {strides = array<i32>} : memref<16x128xf32, #tpu.memory_space<vmem>>, vector<16x128xf32>,
    return
  }
  func.func @transform_0(%arg0: i32) -> (i32, i32) {
    %c0_i32 = arith.constant 0 : i32
    %c0_i32_0 = arith.constant 0 : i32
    return %arg0, %c0_i32 : i32, i32
  }
  func.func @transform_1(%arg0: i32) -> (i32, i32) {
    %c1_i32 = arith.constant 1 : i32
    %c0_i32 = arith.constant 0 : i32
    %0 = arith.cmpi eq, %c1_i32, %c0_i32 : i32
    %c1_i32_0 = arith.constant 1 : i32
    %1 = arith.select %0, %c1_i32_0, %c1_i32 : i32
    %2 = arith.remsi %arg0, %1 : i32
    %c0_i32_1 = arith.constant 0 : i32
    %3 = arith.cmpi ne, %2, %c0_i32_1 : i32
    %c0_i32_2 = arith.constant 0 : i32
    %4 = arith.cmpi slt, %2, %c0_i32_2 : i32
    %c0_i32_3 = arith.constant 0 : i32
    %5 = arith.cmpi slt, %1, %c0_i32_3 : i32
    %6 = arith.xori %4, %5 : i1
    %7 = arith.andi %6, %3 : i1
    %8 = arith.addi %2, %1 : i32
    %9 = arith.select %7, %8, %2 : i32
    %c0_i32_4 = arith.constant 0 : i32
    %c0_i32_5 = arith.constant 0 : i32
    return %9, %c0_i32_4 : i32, i32
  }
  func.func @transform_2(%arg0: i32) -> (i32, i32) {
    %c0_i32 = arith.constant 0 : i32
    %c0_i32_0 = arith.constant 0 : i32
    %c0_i32_1 = arith.constant 0 : i32
    return %c0_i32, %c0_i32_0 : i32, i32
  }
  func.func @transform_3(%arg0: i32) -> (i32, i32) {
    %c0_i32 = arith.constant 0 : i32
    %c0_i32_0 = arith.constant 0 : i32
    %c0_i32_1 = arith.constant 0 : i32
    return %c0_i32, %c0_i32_0 : i32, i32
  }
  func.func @transform_4(%arg0: i32) -> (i32, i32) {
    %c0_i32 = arith.constant 0 : i32
    %c0_i32_0 = arith.constant 0 : i32
    %c0_i32_1 = arith.constant 0 : i32
    return %c0_i32, %c0_i32_0 : i32, i32
  }
  func.func @transform_5(%arg0: i32) -> (i32, i32) {
    %c0_i32 = arith.constant 0 : i32
    %c0_i32_0 = arith.constant 0 : i32
    %c0_i32_1 = arith.constant 0 : i32
    return %c0_i32, %c0_i32_0 : i32, i32
  }
  func.func @transform_6(%arg0: i32) -> (i32, i32) {
    %c0_i32 = arith.constant 0 : i32
    %c0_i32_0 = arith.constant 0 : i32
    return %arg0, %c0_i32 : i32, i32
  }
}

</mosaic_0001>

<llo_original>
// kernel: bert_de_self_output.1
$region0: #{bert_de_self_output.1}
  #allocation0 [shape = 'u32[]', space=smem, size = 0x4, offset = 0x4, fixed_abs, tag = 'smem constant byte address 0x4 - core index']
  #allocation1 [shape = 'u32[144,128]{1,0:T(1,128)}', space=vmem, size = 0x12000, scoped, tag = 'internal scratch']
  %s0 = inlined_call_operand.vmem [shape: f32[32,128], index: 0, kind: input, shape index: {}]
  %s1 = inlined_call_operand.vmem [shape: f32[16,128], index: 1, kind: input, shape index: {}]
  %s2 = inlined_call_operand.hbm [shape: f32[128,128], index: 2, kind: input, shape index: {}]
  %s3 = inlined_call_operand.vmem [shape: f32[1,128], index: 3, kind: input, shape index: {}]
  %s4 = inlined_call_operand.vmem [shape: f32[1,128], index: 4, kind: input, shape index: {}]
  %s5 = inlined_call_operand.vmem [shape: f32[1,128], index: 5, kind: input, shape index: {}]
  %s6 = inlined_call_operand.vmem [shape: f32[32,128], index: 6, kind: output, shape index: {}]
  %s7 = sld [smem:[#allocation0]]
  $region61: #{bert_de_self_output.1} parent=0
    _
  %s9 = ssub.s32 1, %s7
  %s10 = scalar_select 0, %s9, %s7
  $region1: #{bert_de_self_output.1} parent=0
    #allocation2 [shape = 'u8[65536]{0}', space=vmem, size = 0x10000, scoped, tag = 'input window, operand 2, single buffered']
    #allocation3 [shape = 's32[2]{0}', space=sflag, size = 0x8, scoped, tag = 'scoped memory for bert_de_self_output.1']
    %11 = vsyncpa [#allocation3], 0
    loop: start=0, step=1, limit=4
    $region2: #{bert_de_self_output.1} parent=1 // loop_pre_header
      _
    $region3: #{bert_de_self_output.1} parent=1 // loop_header
      %s13 = sphi 0, %s17
      %p14 = scmp.ge.s32.totalorder %s13, 4
      %s23 = sphi 0, %s25
      %s26 = sphi 0, %s23
      %s27 = sphi 0, %s26
      %s43 = sphi 0, %s27
      %s47 = sphi 0, %s47
      %s49 = sphi 0, %s47
      %s50 = sphi 0, %s49
      %s64 = sphi 0, %s50
      %s68 = sphi 0, %s68
      %s70 = sphi 0, %s68
      %s71 = sphi 0, %s70
      %s85 = sphi 0, %s71
      %s89 = sphi 0, %s89
      %s91 = sphi 0, %s89
      %s92 = sphi 0, %s91
      %s106 = sphi 0, %s92
      %s110 = sphi 0, %s110
      %s112 = sphi 0, %s110
      %s113 = sphi 0, %s112
      %s127 = sphi 0, %s113
      %s131 = sphi 0, %s131
      %s133 = sphi 0, %s131
      %s134 = sphi 0, %s133
      %s148 = sphi 0, %s134
      %s154 = sphi 0, %s156
      %s157 = sphi 0, %s154
      %s158 = sphi 0, %s157
      %s174 = sphi 0, %s158
    $region4: #{bert_de_self_output.1} parent=1 // loop_header_branch
      %16 = sbr.rel (%p14) target = $region8
    $region5: #{bert_de_self_output.1} parent=1 // loop_body
      %s18 = ssub.s32 %s13, 1
      %s19 = ssub.s32 %s13, 2
      %s20 = sadd.s32 %s13, 1
      %s21 = ssub.s32 %s13, %s20
      %p22 = scmp.eq.s32.totalorder %s21, 0
      %s24 = sadd.s32 %s23, 1
      %s25 = scalar_select %p22, %s23, %s24
      %p28 = pneg %p22
      %p29 = scmp.eq.s32.totalorder %s13, 1
      %p30 = por %p28, %p29
      %p31 = scmp.ne.s32.totalorder %s23, %s26
      %p32 = scmp.eq.s32.totalorder %s13, 0
      %p33 = por %p31, %p32
      %p34 = scmp.ne.s32.totalorder %s23, %s26
      %p35 = scmp.eq.s32.totalorder %s18, 1
      %p36 = por %p34, %p35
      %p37 = scmp.ne.s32.totalorder %s26, %s27
      %p38 = scmp.eq.s32.totalorder %s18, 0
      %p39 = por %p37, %p38
      %p40 = scmp.ne.s32.totalorder %s26, %s27
      %p41 = scmp.eq.s32.totalorder %s19, 1
      %p42 = por %p40, %p41
      %p44 = scmp.ne.s32.totalorder %s27, %s43
      %p45 = scmp.eq.s32.totalorder %s19, 0
      %p46 = por %p44, %p45
      %s48 = sadd.s32 %s47, 1
      %p51 = scmp.eq.s32.totalorder %s13, 1
      %p52 = scmp.ne.s32.totalorder %s47, %s49
      %p53 = scmp.eq.s32.totalorder %s13, 0
      %p54 = por %p52, %p53
      %p55 = scmp.ne.s32.totalorder %s47, %s49
      %p56 = scmp.eq.s32.totalorder %s18, 1
      %p57 = por %p55, %p56
      %p58 = scmp.ne.s32.totalorder %s49, %s50
      %p59 = scmp.eq.s32.totalorder %s18, 0
      %p60 = por %p58, %p59
      %p61 = scmp.ne.s32.totalorder %s49, %s50
      %p62 = scmp.eq.s32.totalorder %s19, 1
      %p63 = por %p61, %p62
      %p65 = scmp.ne.s32.totalorder %s50, %s64
      %p66 = scmp.eq.s32.totalorder %s19, 0
      %p67 = por %p65, %p66
      %s69 = sadd.s32 %s68, 1
      %p72 = scmp.eq.s32.totalorder %s13, 1
      %p73 = scmp.ne.s32.totalorder %s68, %s70
      %p74 = scmp.eq.s32.totalorder %s13, 0
      %p75 = por %p73, %p74
      %p76 = scmp.ne.s32.totalorder %s68, %s70
      %p77 = scmp.eq.s32.totalorder %s18, 1
      %p78 = por %p76, %p77
      %p79 = scmp.ne.s32.totalorder %s70, %s71
      %p80 = scmp.eq.s32.totalorder %s18, 0
      %p81 = por %p79, %p80
      %p82 = scmp.ne.s32.totalorder %s70, %s71
      %p83 = scmp.eq.s32.totalorder %s19, 1
      %p84 = por %p82, %p83
      %p86 = scmp.ne.s32.totalorder %s71, %s85
      %p87 = scmp.eq.s32.totalorder %s19, 0
      %p88 = por %p86, %p87
      %s90 = sadd.s32 %s89, 1
      %p93 = scmp.eq.s32.totalorder %s13, 1
      %p94 = scmp.ne.s32.totalorder %s89, %s91
      %p95 = scmp.eq.s32.totalorder %s13, 0
      %p96 = por %p94, %p95
      %p97 = scmp.ne.s32.totalorder %s89, %s91
      %p98 = scmp.eq.s32.totalorder %s18, 1
      %p99 = por %p97, %p98
      %p100 = scmp.ne.s32.totalorder %s91, %s92
      %p101 = scmp.eq.s32.totalorder %s18, 0
      %p102 = por %p100, %p101
      %p103 = scmp.ne.s32.totalorder %s91, %s92
      %p104 = scmp.eq.s32.totalorder %s19, 1
      %p105 = por %p103, %p104
      %p107 = scmp.ne.s32.totalorder %s92, %s106
      %p108 = scmp.eq.s32.totalorder %s19, 0
      %p109 = por %p107, %p108
      %s111 = sadd.s32 %s110, 1
      %p114 = scmp.eq.s32.totalorder %s13, 1
      %p115 = scmp.ne.s32.totalorder %s110, %s112
      %p116 = scmp.eq.s32.totalorder %s13, 0
      %p117 = por %p115, %p116
      %p118 = scmp.ne.s32.totalorder %s110, %s112
      %p119 = scmp.eq.s32.totalorder %s18, 1
      %p120 = por %p118, %p119
      %p121 = scmp.ne.s32.totalorder %s112, %s113
      %p122 = scmp.eq.s32.totalorder %s18, 0
      %p123 = por %p121, %p122
      %p124 = scmp.ne.s32.totalorder %s112, %s113
      %p125 = scmp.eq.s32.totalorder %s19, 1
      %p126 = por %p124, %p125
      %p128 = scmp.ne.s32.totalorder %s113, %s127
      %p129 = scmp.eq.s32.totalorder %s19, 0
      %p130 = por %p128, %p129
      %s132 = sadd.s32 %s131, 1
      %p135 = scmp.eq.s32.totalorder %s13, 1
      %p136 = scmp.ne.s32.totalorder %s131, %s133
      %p137 = scmp.eq.s32.totalorder %s13, 0
      %p138 = por %p136, %p137
      %p139 = scmp.ne.s32.totalorder %s131, %s133
      %p140 = scmp.eq.s32.totalorder %s18, 1
      %p141 = por %p139, %p140
      %p142 = scmp.ne.s32.totalorder %s133, %s134
      %p143 = scmp.eq.s32.totalorder %s18, 0
      %p144 = por %p142, %p143
      %p145 = scmp.ne.s32.totalorder %s133, %s134
      %p146 = scmp.eq.s32.totalorder %s19, 1
      %p147 = por %p145, %p146
      %p149 = scmp.ne.s32.totalorder %s134, %s148
      %p150 = scmp.eq.s32.totalorder %s19, 0
      %p151 = por %p149, %p150
      %s152 = ssub.s32 %s13, %s20
      %p153 = scmp.eq.s32.totalorder %s152, 0
      %s155 = sadd.s32 %s154, 1
      %s156 = scalar_select %p153, %s154, %s155
      %p159 = pneg %p153
      %p160 = scmp.eq.s32.totalorder %s13, 1
      %p161 = por %p159, %p160
      %p162 = scmp.ne.s32.totalorder %s154, %s157
      %p163 = scmp.eq.s32.totalorder %s13, 0
      %p164 = por %p162, %p163
      %p165 = scmp.ne.s32.totalorder %s154, %s157
      %p166 = scmp.eq.s32.totalorder %s18, 1
      %p167 = por %p165, %p166
      %p168 = scmp.ne.s32.totalorder %s157, %s158
      %p169 = scmp.eq.s32.totalorder %s18, 0
      %p170 = por %p168, %p169
      %p171 = scmp.ne.s32.totalorder %s157, %s158
      %p172 = scmp.eq.s32.totalorder %s19, 1
      %p173 = por %p171, %p172
      %p175 = scmp.ne.s32.totalorder %s158, %s174
      %p176 = scmp.eq.s32.totalorder %s19, 0
      %p177 = por %p175, %p176
      %p178 = scmp.le.s32.totalorder 1, %s13
      %p179 = scmp.lt.s32.totalorder %s13, 3
      %p180 = pnand %p178, %p179
      %p181 = pneg %p180
      // Predicated region
      $region9: #{bert_de_self_output.1} parent=5 // pred_check
        _
      $region10: #{bert_de_self_output.1} parent=5 // pred_check_branch
        %183 = sbr.rel (%p180) target = $region12
      $region11: #{bert_de_self_output.1} parent=5 // pred_region
        %s184 = ssub.s32 %s13, 1
        // Predicated region
        $region13: #{bert_de_self_output.1} parent=11 // pred_check
          %p185 = pneg %p60
        $region14: #{bert_de_self_output.1} parent=11 // pred_check_branch
          %187 = sbr.rel (%p185) target = $region16
        $region15: #{bert_de_self_output.1} parent=11 // pred_region
          _
        $region16: #{bert_de_self_output.1} parent=11 // pred_fallthru
          _
        // Predicated region
        $region17: #{bert_de_self_output.1} parent=11 // pred_check
          %p188 = pneg %p81
        $region18: #{bert_de_self_output.1} parent=11 // pred_check_branch
          %190 = sbr.rel (%p188) target = $region20
        $region19: #{bert_de_self_output.1} parent=11 // pred_region
          %s192 = ssub.s32 2048, 2048
          %193 = vsyncadd [#allocation3], %s192
          %s194 = sshll.u32 [#allocation2], 4
          %s195 = int_to_ptr.vmem [resolvable:$true] %s194
          %200 = dma.hbm_to_vmem [thread:$0]  %s2, 2048, %s195, [#allocation3], 128, 128, 8
        $region20: #{bert_de_self_output.1} parent=11 // pred_fallthru
          _
        // Predicated region
        $region21: #{bert_de_self_output.1} parent=11 // pred_check
          %p201 = pneg %p102
        $region22: #{bert_de_self_output.1} parent=11 // pred_check_branch
          %203 = sbr.rel (%p201) target = $region24
        $region23: #{bert_de_self_output.1} parent=11 // pred_region
          _
        $region24: #{bert_de_self_output.1} parent=11 // pred_fallthru
          _
        // Predicated region
        $region25: #{bert_de_self_output.1} parent=11 // pred_check
          %p204 = pneg %p123
        $region26: #{bert_de_self_output.1} parent=11 // pred_check_branch
          %206 = sbr.rel (%p204) target = $region28
        $region27: #{bert_de_self_output.1} parent=11 // pred_region
          _
        $region28: #{bert_de_self_output.1} parent=11 // pred_fallthru
          _
        // Predicated region
        $region29: #{bert_de_self_output.1} parent=11 // pred_check
          %p207 = pneg %p144
        $region30: #{bert_de_self_output.1} parent=11 // pred_check_branch
          %209 = sbr.rel (%p207) target = $region32
        $region31: #{bert_de_self_output.1} parent=11 // pred_region
          _
        $region32: #{bert_de_self_output.1} parent=11 // pred_fallthru
          _
      $region12: #{bert_de_self_output.1} parent=5 // pred_fallthru
        _
      %p210 = scmp.lt.s32.totalorder %s13, 2
      // Predicated region
      $region33: #{bert_de_self_output.1} parent=5 // pred_check
        %p211 = pneg %p210
      $region34: #{bert_de_self_output.1} parent=5 // pred_check_branch
        %213 = sbr.rel (%p211) target = $region36
      $region35: #{bert_de_self_output.1} parent=5 // pred_region
        // Predicated region
        $region37: #{bert_de_self_output.1} parent=35 // pred_check
          %p214 = pneg %p33
        $region38: #{bert_de_self_output.1} parent=35 // pred_check_branch
          %216 = sbr.rel (%p214) target = $region40
        $region39: #{bert_de_self_output.1} parent=35 // pred_region
          %s217 = smul.u32 2, %s13
          %p218 = scmp.lt.s32.totalorder %s217, 3
          %s219 = scalar_select %p218, %s217, 3
          %s220 = smul.addr %s219, 8
          %s221 = scalar_lea.vmem %s0, %s220
          %s222 = smul.u32 2, %s13
        $region40: #{bert_de_self_output.1} parent=35 // pred_fallthru
          _
      $region36: #{bert_de_self_output.1} parent=5 // pred_fallthru
        _
      %p223 = scmp.le.s32.totalorder 1, %s13
      %p224 = scmp.lt.s32.totalorder %s13, 3
      %p225 = pnand %p223, %p224
      %p226 = pneg %p225
      // Predicated region
      $region41: #{bert_de_self_output.1} parent=5 // pred_check
        _
      $region42: #{bert_de_self_output.1} parent=5 // pred_check_branch
        %228 = sbr.rel (%p225) target = $region44
      $region43: #{bert_de_self_output.1} parent=5 // pred_region
        %s229 = ssub.s32 %s13, 1
        // Predicated region
        $region45: #{bert_de_self_output.1} parent=43 // pred_check
          %p230 = pneg %p81
        $region46: #{bert_de_self_output.1} parent=43 // pred_check_branch
          %232 = sbr.rel (%p230) target = $region48
        $region47: #{bert_de_self_output.1} parent=43 // pred_region
          %233 = dma.done [#allocation3], 2048
        $region48: #{bert_de_self_output.1} parent=43 // pred_fallthru
          _
        %s234 = smul.u32 2, %s18
        %p235 = scmp.lt.s32.totalorder %s234, 3
        %s236 = scalar_select %p235, %s234, 3
        %s237 = smul.addr %s236, 8
        %s238 = scalar_lea.vmem %s0, %s237
        %p239 = pneg %p39
        %p240 = pneg %p36
        %p241 = pneg %p60
        %p242 = pneg %p57
        %p243 = pneg %p81
        %p244 = pneg %p78
        %p245 = pneg %p102
        %p246 = pneg %p99
        %p247 = pneg %p123
        %p248 = pneg %p120
        %p249 = pneg %p144
        %p250 = pneg %p141
        %p251 = pneg %p170
        %p252 = pneg %p167
        %s253 = smul.u32 2, %s18
        %p254 = scmp.lt.s32.totalorder %s253, 3
        %s255 = scalar_select %p254, %s253, 3
        %s256 = smul.addr %s255, 8
        %s257 = scalar_lea.vmem %s6, %s256
        %s258 = smul.u32 2, %s18
        %p259 = scmp.lt.s32.totalorder %s258, 3
        %s260 = scalar_select %p259, %s258, 3
        %s261 = smul.addr %s260, 8
        %s262 = scalar_lea.vmem %s0, %s261
        %s263 = smul.u32 2, %s18
        %s264 = smul.u32 2, %s18
        %p265 = scmp.lt.s32.totalorder %s264, 3
        %s266 = scalar_select %p265, %s264, 3
        %s267 = smul.addr %s266, 8
        %s268 = scalar_lea.vmem %s6, %s267
        %s269 = smul.u32 2, %s18
        %v270 = vld [vmem:[%s262] sm:$0xff]
        %v271 = vld [vmem:[%s262 + $0x8] sm:$0xff]
        %v272 = vld [vmem:[#allocation2] sm:$0xff]
        %v273 = vld [vmem:[#allocation2 + $0x8] sm:$0xff]
        %v274 = vld [vmem:[#allocation2 + $0x10] sm:$0xff]
        %v275 = vld [vmem:[#allocation2 + $0x18] sm:$0xff]
        %v276 = vld [vmem:[#allocation2 + $0x20] sm:$0xff]
        %v277 = vld [vmem:[#allocation2 + $0x28] sm:$0xff]
        %v278 = vld [vmem:[#allocation2 + $0x30] sm:$0xff]
        %v279 = vld [vmem:[#allocation2 + $0x38] sm:$0xff]
        %v280 = vld [vmem:[#allocation2 + $0x40] sm:$0xff]
        %v281 = vld [vmem:[#allocation2 + $0x48] sm:$0xff]
        %v282 = vld [vmem:[#allocation2 + $0x50] sm:$0xff]
        %v283 = vld [vmem:[#allocation2 + $0x58] sm:$0xff]
        %v284 = vld [vmem:[#allocation2 + $0x60] sm:$0xff]
        %v285 = vld [vmem:[#allocation2 + $0x68] sm:$0xff]
        %v286 = vld [vmem:[#allocation2 + $0x70] sm:$0xff]
        %v287 = vld [vmem:[#allocation2 + $0x78] sm:$0xff]
        %v288 = vld [vmem:[%s3] sm:$0x1]
        %v290 = vlaneseq
        %v291 = vshrl.u32 %v290, 7
        %v292 = vsub.s32 0, %v291
        %v293 = vrot.slane %v288, %v292
        %295 = vmatprep.subr.mxu0 0.0
        %296 = vmatpush1.msra.mxu0 %v272
        %297 = vmatprep.subr.mxu0 0.0
        %298 = vmatpush1.msra.mxu0 %v273
        %299 = vmatprep.subr.mxu0 0.0
        %300 = vmatpush1.msra.mxu0 %v274
        %301 = vmatprep.subr.mxu0 0.0
        %302 = vmatpush1.msra.mxu0 %v275
        %303 = vmatprep.subr.mxu0 0.0
        %304 = vmatpush1.msra.mxu0 %v276
        %305 = vmatprep.subr.mxu0 0.0
        %306 = vmatpush1.msra.mxu0 %v277
        %307 = vmatprep.subr.mxu0 0.0
        %308 = vmatpush1.msra.mxu0 %v278
        %309 = vmatprep.subr.mxu0 0.0
        %310 = vmatpush1.msra.mxu0 %v279
        %311 = vmatprep.subr.mxu0 0.0
        %312 = vmatpush1.msra.mxu0 %v280
        %313 = vmatprep.subr.mxu0 0.0
        %314 = vmatpush1.msra.mxu0 %v281
        %315 = vmatprep.subr.mxu0 0.0
        %316 = vmatpush1.msra.mxu0 %v282
        %317 = vmatprep.subr.mxu0 0.0
        %318 = vmatpush1.msra.mxu0 %v283
        %319 = vmatprep.subr.mxu0 0.0
        %320 = vmatpush1.msra.mxu0 %v284
        %321 = vmatprep.subr.mxu0 0.0
        %322 = vmatpush1.msra.mxu0 %v285
        %323 = vmatprep.subr.mxu0 0.0
        %324 = vmatpush1.msra.mxu0 %v286
        %325 = vmatprep.subr.mxu0 0.0
        %326 = vmatpush1.msra.mxu0 %v287
        %327 = vmatprep.subr.mxu0 0.0
        %328 = vmatpush1.msra.mxu0 0.0
        %329 = vmatprep.subr.mxu0 0.0
        %330 = vmatpush1.msra.mxu0 0.0
        %331 = vmatprep.subr.mxu0 0.0
        %332 = vmatpush1.msra.mxu0 0.0
        %333 = vmatprep.subr.mxu0 0.0
        %334 = vmatpush1.msra.mxu0 0.0
        %335 = vmatprep.subr.mxu0 0.0
        %336 = vmatpush1.msra.mxu0 0.0
        %337 = vmatprep.subr.mxu0 0.0
        %338 = vmatpush1.msra.mxu0 0.0
        %339 = vmatprep.subr.mxu0 0.0
        %340 = vmatpush1.msra.mxu0 0.0
        %341 = vmatprep.subr.mxu0 0.0
        %342 = vmatpush1.msra.mxu0 0.0
        %343 = vmatprep.subr.mxu0 0.0
        %344 = vmatpush1.msra.mxu0 0.0
        %345 = vmatprep.subr.mxu0 0.0
        %346 = vmatpush1.msra.mxu0 0.0
        %347 = vmatprep.subr.mxu0 0.0
        %348 = vmatpush1.msra.mxu0 0.0
        %349 = vmatprep.subr.mxu0 0.0
        %350 = vmatpush1.msra.mxu0 0.0
        %351 = vmatprep.subr.mxu0 0.0
        %352 = vmatpush1.msra.mxu0 0.0
        %353 = vmatprep.subr.mxu0 0.0
        %354 = vmatpush1.msra.mxu0 0.0
        %355 = vmatprep.subr.mxu0 0.0
        %356 = vmatpush1.msra.mxu0 0.0
        %357 = vmatprep.subr.mxu0 0.0
        %358 = vmatpush1.msra.mxu0 0.0
        %359 = vmatprep.mubr.f32.mxu0 0.0
        %360 = vmatmul.mubr.f32.gmra.mrb[0].mxu0 %v270
        %v361 = vpop.f32.mrb[0].mxu0
        %v362 = vadd.f32 %v293, %v361
        %v363 = vpop.f32.mrb[0].mxu0
        %364 = vmatprep.mubr.f32.mxu0 0.0
        %365 = vmatmul.mubr.f32.gmra.mrb[0].mxu0 %v271
        %v366 = vpop.f32.mrb[0].mxu0
        %v367 = vadd.f32 %v293, %v366
        %v368 = vpop.f32.mrb[0].mxu0
        %369 = vdwg.mxu0
        %v370 = vld [vmem:[%s1] sm:$0xff]
        %v371 = vld [vmem:[%s1 + $0x8] sm:$0xff]
        %v372 = vadd.f32 %v362, %v370
        %v373 = vadd.f32 %v367, %v371
        %374 = vadd.xlane.f32.xlu0 %v372
        %v375 = vpop.xlane.xlu0 %374
        %376 = vadd.xlane.f32.xlu0 %v373
        %v377 = vpop.xlane.xlu0 %376
        %v378 = vrcp.pop 128.0
        %v379 = vmul.f32 %v375, %v378
        %v380 = vmul.f32 %v377, %v378
        %v381 = vsub.f32 %v372, %v379
        %v382 = vsub.f32 %v373, %v380
        %v383 = vmul.f32 %v381, %v381
        %v384 = vmul.f32 %v382, %v382
        %385 = vadd.xlane.f32.xlu0 %v383
        %v386 = vpop.xlane.xlu0 %385
        %387 = vadd.xlane.f32.xlu0 %v384
        %v388 = vpop.xlane.xlu0 %387
        %v389 = vmul.f32 %v386, %v378
        %v390 = vmul.f32 %v388, %v378
        %v391 = vadd.f32 %v389, 1e-12
        %v392 = vadd.f32 %v390, 1e-12
        %v393 = vrsqrt.pop %v391
        %v394 = vrsqrt.pop %v392
        %v395 = vmul.f32 %v381, %v393
        %v396 = vmul.f32 %v382, %v394
        %v397 = vld [vmem:[%s4] sm:$0x1]
        %v399 = vlaneseq
        %v400 = vshrl.u32 %v399, 7
        %v401 = vsub.s32 0, %v400
        %v402 = vrot.slane %v397, %v401
        %v404 = vmul.f32 %v402, %v395
        %v405 = vmul.f32 %v402, %v396
        %v406 = vld [vmem:[%s5] sm:$0x1]
        %v408 = vlaneseq
        %v409 = vshrl.u32 %v408, 7
        %v410 = vsub.s32 0, %v409
        %v411 = vrot.slane %v406, %v410
        %v413 = vadd.f32 %v404, %v411
        %v414 = vadd.f32 %v405, %v411
        %415 = vst [vmem:[%s268] sm:$0xff] %v413
        %416 = vst [vmem:[%s268 + $0x8] sm:$0xff] %v414
        %s417 = smul.u32 2, %s18
        %p418 = scmp.lt.s32.totalorder %s417, 3
        %s419 = scalar_select %p418, %s417, 3
        %s420 = smul.addr %s419, 8
        %s421 = scalar_lea.vmem %s6, %s420
        // Predicated region
        $region49: #{bert_de_self_output.1} parent=43 // pred_check
          %p422 = pneg %p167
        $region50: #{bert_de_self_output.1} parent=43 // pred_check_branch
          %424 = sbr.rel (%p422) target = $region52
        $region51: #{bert_de_self_output.1} parent=43 // pred_region
          %s425 = smul.u32 2, %s18
        $region52: #{bert_de_self_output.1} parent=43 // pred_fallthru
          _
      $region44: #{bert_de_self_output.1} parent=5 // pred_fallthru
        _
      %p426 = scmp.le.s32.totalorder 2, %s13
      // Predicated region
      $region53: #{bert_de_self_output.1} parent=5 // pred_check
        %p427 = pneg %p426
      $region54: #{bert_de_self_output.1} parent=5 // pred_check_branch
        %429 = sbr.rel (%p427) target = $region56
      $region55: #{bert_de_self_output.1} parent=5 // pred_region
        %s430 = ssub.s32 %s13, 2
        // Predicated region
        $region57: #{bert_de_self_output.1} parent=55 // pred_check
          %p431 = pneg %p173
        $region58: #{bert_de_self_output.1} parent=55 // pred_check_branch
          %433 = sbr.rel (%p431) target = $region60
        $region59: #{bert_de_self_output.1} parent=55 // pred_region
          %s434 = smul.u32 2, %s19
          %p435 = scmp.lt.s32.totalorder %s434, 3
          %s436 = scalar_select %p435, %s434, 3
          %s437 = smul.addr %s436, 8
          %s438 = scalar_lea.vmem %s6, %s437
        $region60: #{bert_de_self_output.1} parent=55 // pred_fallthru
          _
      $region56: #{bert_de_self_output.1} parent=5 // pred_fallthru
        _
    $region6: #{bert_de_self_output.1} parent=1 // loop_footer
      %s17 = sadd.s32 1, %s13
    $region7: #{bert_de_self_output.1} parent=1 // loop_footer_branch
      %12 = sbr.rel target = $region3
    $region8: #{bert_de_self_output.1} parent=1 // loop_exit
      _
    %439 = vsyncpa [#allocation3], 1
    %s440 = scalar_lea.sflag [#allocation3], 1
    %441 = vsyncpa %s440, 1

</llo_original>
